<compile_context>
chip_gen: v7x
topology: tpu7x:2x2x1
jax: 0.10.0
libtpu: 0.0.40
codegen_flags: <defaults>
</compile_context>

<pallas_src>
import functools

import jax
import jax.numpy as jnp
from jax.experimental import pallas as pl
from jax.experimental.pallas import tpu as pltpu


def _round_up(n, m):
    return ((n + m - 1) // m) * m


def _choose_tiles(B):
    """Pick (TB, B_pad).  TB always a multiple of 8 and divides B_pad."""
    if B < 16:
        tb = _round_up(max(B, 1), 8)
        return tb, tb                      # single tiny tile
    if B <= 2048:
        b_pad = _round_up(B, 16)
        return b_pad // 2, b_pad           # exactly 2 grid steps (v7x 2-TC split)
    tb = 1024
    return tb, _round_up(B, tb)            # large batch: 1024-row tiles


# ----------------------------------------------------------------------------
# Kernel: whole MLP on one batch tile.  `layout` is a static tuple of
# (row_offset, rows, cols) describing where each folded weight lives in the
# packed bf16 slab; row i of the f32 c-slab holds that layer's bias/BN offset.
# ----------------------------------------------------------------------------
def _mlp_kernel(layout, x_ref, w_ref, c_ref, o_ref):
    def layer(h, idx, relu):
        r0, rk, cn = layout[idx]
        z = jnp.dot(h, w_ref[r0:r0 + rk, :cn],
                    preferred_element_type=jnp.float32) + c_ref[idx:idx + 1, :cn]
        if relu:
            return jnp.maximum(z, jnp.float32(0)).astype(jnp.bfloat16)
        return z

    h = x_ref[...]                                   # (TB, F) bf16
    for li in range(4):
        h = layer(h, li, relu=True)
    o_ref[...] = layer(h, 4, relu=False)             # (TB, out_dim) f32


# ----------------------------------------------------------------------------
# Parameter construction / packing
# ----------------------------------------------------------------------------
def init_params(key, m_agents, p_preys, action_size, agent_id, eps=1e-5):
    """Deterministic synthetic parameters with the shapes implied by __init__."""
    assert agent_id != 0
    state_dims = (m_agents + p_preys) * 2 + p_preys
    dims = [state_dims, 128, 256, 128, 64, action_size * agent_id]

    params = {}
    keys = jax.random.split(key, 64)
    ki = 0
    for li in range(5):
        fan_in, fan_out = dims[li], dims[li + 1]
        w = jax.random.normal(keys[ki], (fan_in, fan_out), jnp.float32) * 0.1
        ki += 1
        b = jax.random.normal(keys[ki], (1, fan_out), jnp.float32) * 0.05
        ki += 1
        params[f"w{li + 1}"] = w
        params[f"b{li + 1}"] = b
        if li < 4:  # BatchNorm after the first 4 linears (eval mode)
            gamma = 1.0 + 0.1 * jax.random.normal(keys[ki], (1, fan_out), jnp.float32)
            ki += 1
            beta = 0.05 * jax.random.normal(keys[ki], (1, fan_out), jnp.float32)
            ki += 1
            rmean = 0.1 * jax.random.normal(keys[ki], (1, fan_out), jnp.float32)
            ki += 1
            rvar = 1.0 + 0.1 * jax.nn.softplus(
                jax.random.normal(keys[ki], (1, fan_out), jnp.float32))
            ki += 1
            s = gamma / jnp.sqrt(rvar + eps)        # y = s*z + t
            t = beta - rmean * s
            params[f"s{li + 1}"] = s
            params[f"t{li + 1}"] = t
    return params


def prepare_params(params):
    """Fold eval-mode BN + bias into the weights, cast to bf16, and pack all
    layers into one weight slab + one offset slab."""
    WPAD = 256  # slab width = widest layer

    folded_w, folded_c = [], []
    for li in range(1, 5):
        w = params[f"w{li}"] * params[f"s{li}"]                  # (in,out)*(1,out)
        c = params[f"b{li}"] * params[f"s{li}"] + params[f"t{li}"]
        folded_w.append(w)
        folded_c.append(c)
    folded_w.append(params["w5"])
    folded_c.append(params["b5"])

    slab_rows, layout, row = [], [], 0
    for w in folded_w:
        r, cdim = w.shape
        r_pad = _round_up(r, 16)                                 # bf16 sublane tile
        wp = jnp.pad(w, ((0, r_pad - r), (0, WPAD - cdim)))
        slab_rows.append(wp.astype(jnp.bfloat16))
        layout.append((row, r, cdim))
        row += r_pad
    w_slab = jnp.concatenate(slab_rows, axis=0)                  # (~592, 256) bf16

    c_slab = jnp.zeros((8, WPAD), jnp.float32)
    for i, c in enumerate(folded_c):
        c_slab = c_slab.at[i, :c.shape[1]].set(c[0])

    out_dim = params["w5"].shape[1]
    prep = {"w": w_slab, "c": c_slab}
    return prep, tuple(layout), out_dim


# ----------------------------------------------------------------------------
# Wrapper
# ----------------------------------------------------------------------------
@functools.partial(jax.jit, static_argnames=("layout", "out_dim"))
def iq_network_mcts_forward(x, prep, layout, out_dim):
    B, F = x.shape
    TB, B_pad = _choose_tiles(B)

    x = x.astype(jnp.bfloat16)                       # cast once in the wrapper
    if B_pad != B:
        x = jnp.pad(x, ((0, B_pad - B), (0, 0)))     # zero rows, sliced off below

    kernel = functools.partial(_mlp_kernel, layout)

    flops = 2 * B_pad * sum(r * c for _, r, c in layout)
    bytes_accessed = (B_pad * F * 2                  # x (bf16)
                      + B_pad * out_dim * 4          # out (f32)
                      + prep["w"].size * 2 + prep["c"].size * 4)

    out = pl.pallas_call(
        kernel,
        out_shape=jax.ShapeDtypeStruct((B_pad, out_dim), jnp.float32),
        grid=(B_pad // TB,),
        in_specs=[
            pl.BlockSpec((TB, F), lambda i: (i, 0)),
            # Constant index maps => slabs loaded once, resident across tiles.
            pl.BlockSpec(prep["w"].shape, lambda i: (0, 0)),
            pl.BlockSpec(prep["c"].shape, lambda i: (0, 0)),
        ],
        out_specs=pl.BlockSpec((TB, out_dim), lambda i: (i, 0)),
        compiler_params=pltpu.CompilerParams(
            dimension_semantics=("parallel",)),      # v7x: shard batch across 2 TCs
        cost_estimate=pl.CostEstimate(
            flops=flops, transcendentals=0, bytes_accessed=bytes_accessed),
    )(x, prep["w"], prep["c"])

    return out if B_pad == B else out[:B]


# ----------------------------------------------------------------------------
# References
# ----------------------------------------------------------------------------
def _reference_forward_f32(x, params):
    """Pure-JAX f32 reference of the original module (eval-mode BN)."""
    h = x
    for li in range(1, 5):
        h = h @ params[f"w{li}"] + params[f"b{li}"]
        h = h * params[f"s{li}"] + params[f"t{li}"]
        h = jnp.maximum(h, 0.0)
    return h @ params["w5"] + params["b5"]


def _reference_forward_prepared(x, prep, layout, out_dim):
    """Pure-JAX reference with the same bf16/f32-accum semantics as the kernel."""
    h = x.astype(jnp.bfloat16)
    out = None
    for i in range(5):
        r0, rk, cn = layout[i]
        w = prep["w"][r0:r0 + rk, :cn]
        c = prep["c"][i, :cn]
        z = jnp.dot(h, w, preferred_element_type=jnp.float32) + c
        if i < 4:
            h = jnp.maximum(z, 0.0).astype(jnp.bfloat16)
        else:
            out = z
    return out[:, :out_dim]


if __name__ == "__main__":
    # Small, forward-consistent shapes.
    m_agents, p_preys, action_size, agent_id = 3, 2, 5, 2
    state_dims = (m_agents + p_preys) * 2 + p_preys   # = 12
    out_expected = action_size * agent_id             # = 10

    key = jax.random.PRNGKey(0)
    k_params, k_x1, k_x2 = jax.random.split(key, 3)
    params = init_params(k_params, m_agents, p_preys, action_size, agent_id)
    prep, layout, out_dim = prepare_params(params)
    assert out_dim == out_expected

    # Case 1: tiny batch (module-implied scale), single grid step.
    x_small = jax.random.normal(k_x1, (8, state_dims), jnp.float32)
    out_small = jax.block_until_ready(
        iq_network_mcts_forward(x_small, prep, layout, out_dim))
    assert out_small.shape == (8, out_expected)

    ref_bf16 = _reference_forward_prepared(x_small, prep, layout, out_dim)
    ref_f32 = _reference_forward_f32(x_small, params)
    assert jnp.allclose(out_small, ref_bf16, atol=2e-3, rtol=2e-3), \
        "mismatch vs bf16-semantics reference"
    assert jnp.allclose(out_small, ref_f32, atol=5e-2, rtol=5e-2), \
        "mismatch vs f32 reference (beyond bf16 tolerance)"

    # Case 2: larger, non-multiple batch — exercises 2-step grid + row padding.
    x_big = jax.random.normal(k_x2, (300, state_dims), jnp.float32)
    out_big = jax.block_until_ready(
        iq_network_mcts_forward(x_big, prep, layout, out_dim))
    assert out_big.shape == (300, out_expected)
    ref_big = _reference_forward_prepared(x_big, prep, layout, out_dim)
    assert jnp.allclose(out_big, ref_big, atol=2e-3, rtol=2e-3), \
        "mismatch vs reference on gridded batch"

    print("KERNEL_OK")
</pallas_src>

<mosaic_0001>
module attributes {stable_mosaic.version = 11 : i64} {
  func.func @_mlp_kernel(%arg0: i32, %arg1: memref<8x12xbf16, #tpu.memory_space<vmem>>, %arg2: memref<592x256xbf16, #tpu.memory_space<vmem>>, %arg3: memref<8x256xf32, #tpu.memory_space<vmem>>, %arg4: memref<8x10xf32, #tpu.memory_space<vmem>>) attributes {dimension_semantics = [#tpu.dimension_semantics<parallel>], iteration_bounds = array<i64: 1>, scalar_prefetch = 0 : i64, scratch_operands = 0 : i64, tpu.core_type = #tpu.core_type<tc>, window_params = [{transform_indices = @transform_0, window_bounds = array<i64: 8, 12>}, {pipeline_mode = #tpu.pipeline_mode<synchronous>, transform_indices = @transform_1, window_bounds = array<i64: 592, 256>}, {pipeline_mode = #tpu.pipeline_mode<synchronous>, transform_indices = @transform_2, window_bounds = array<i64: 8, 256>}, {transform_indices = @transform_3, window_bounds = array<i64: 8, 10>}]} {
    %c0 = arith.constant 0 : index
    %c0_0 = arith.constant 0 : index
    %0 = vector.load %arg1[%c0, %c0_0] : memref<8x12xbf16, #tpu.memory_space<vmem>>, vector<8x12xbf16>
    %c0_1 = arith.constant 0 : index
    %c0_2 = arith.constant 0 : index
    %1 = vector.load %arg2[%c0_1, %c0_2] : memref<592x256xbf16, #tpu.memory_space<vmem>>, vector<12x128xbf16>
    %cst = arith.constant dense<0.000000e+00> : vector<8x128xf32>
    %2 = tpu.matmul %0, %1, %cst {dimension_numbers = #tpu.dot_dimension_numbers<[1], [0], [0], [1], [0, 0, 1, 1], [], []>} : vector<8x12xbf16>, vector<12x128xbf16>, vector<8x128xf32> -> vector<8x128xf32>
    %c0_3 = arith.constant 0 : index
    %c0_4 = arith.constant 0 : index
    %3 = vector.load %arg3[%c0_3, %c0_4] : memref<8x256xf32, #tpu.memory_space<vmem>>, vector<1x128xf32>
    %4 = vector.broadcast %3 : vector<1x128xf32> to vector<8x128xf32>
    %5 = arith.addf %2, %4 : vector<8x128xf32>
    %cst_5 = arith.constant 0.000000e+00 : f32
    %6 = vector.broadcast %cst_5 : f32 to vector<8x128xf32>
    %7 = arith.maximumf %5, %6 : vector<8x128xf32>
    %8 = arith.truncf %7 : vector<8x128xf32> to vector<8x128xbf16>
    %c16 = arith.constant 16 : index
    %c0_6 = arith.constant 0 : index
    %9 = vector.load %arg2[%c16, %c0_6] : memref<592x256xbf16, #tpu.memory_space<vmem>>, vector<128x256xbf16>
    %cst_7 = arith.constant dense<0.000000e+00> : vector<8x256xf32>
    %10 = tpu.matmul %8, %9, %cst_7 {dimension_numbers = #tpu.dot_dimension_numbers<[1], [0], [0], [1], [0, 0, 1, 1], [], []>} : vector<8x128xbf16>, vector<128x256xbf16>, vector<8x256xf32> -> vector<8x256xf32>
    %c1 = arith.constant 1 : index
    %c0_8 = arith.constant 0 : index
    %11 = vector.load %arg3[%c1, %c0_8] : memref<8x256xf32, #tpu.memory_space<vmem>>, vector<1x256xf32>
    %12 = vector.broadcast %11 : vector<1x256xf32> to vector<8x256xf32>
    %13 = arith.addf %10, %12 : vector<8x256xf32>
    %cst_9 = arith.constant 0.000000e+00 : f32
    %14 = vector.broadcast %cst_9 : f32 to vector<8x256xf32>
    %15 = arith.maximumf %13, %14 : vector<8x256xf32>
    %16 = arith.truncf %15 : vector<8x256xf32> to vector<8x256xbf16>
    %c144 = arith.constant 144 : index
    %c0_10 = arith.constant 0 : index
    %17 = vector.load %arg2[%c144, %c0_10] : memref<592x256xbf16, #tpu.memory_space<vmem>>, vector<256x128xbf16>
    %cst_11 = arith.constant dense<0.000000e+00> : vector<8x128xf32>
    %18 = tpu.matmul %16, %17, %cst_11 {dimension_numbers = #tpu.dot_dimension_numbers<[1], [0], [0], [1], [0, 0, 1, 1], [], []>} : vector<8x256xbf16>, vector<256x128xbf16>, vector<8x128xf32> -> vector<8x128xf32>
    %c2 = arith.constant 2 : index
    %c0_12 = arith.constant 0 : index
    %19 = vector.load %arg3[%c2, %c0_12] : memref<8x256xf32, #tpu.memory_space<vmem>>, vector<1x128xf32>
    %20 = vector.broadcast %19 : vector<1x128xf32> to vector<8x128xf32>
    %21 = arith.addf %18, %20 : vector<8x128xf32>
    %cst_13 = arith.constant 0.000000e+00 : f32
    %22 = vector.broadcast %cst_13 : f32 to vector<8x128xf32>
    %23 = arith.maximumf %21, %22 : vector<8x128xf32>
    %24 = arith.truncf %23 : vector<8x128xf32> to vector<8x128xbf16>
    %c400 = arith.constant 400 : index
    %c0_14 = arith.constant 0 : index
    %25 = vector.load %arg2[%c400, %c0_14] : memref<592x256xbf16, #tpu.memory_space<vmem>>, vector<128x64xbf16>
    %cst_15 = arith.constant dense<0.000000e+00> : vector<8x64xf32>
    %26 = tpu.matmul %24, %25, %cst_15 {dimension_numbers = #tpu.dot_dimension_numbers<[1], [0], [0], [1], [0, 0, 1, 1], [], []>} : vector<8x128xbf16>, vector<128x64xbf16>, vector<8x64xf32> -> vector<8x64xf32>
    %c3 = arith.constant 3 : index
    %c0_16 = arith.constant 0 : index
    %27 = vector.load %arg3[%c3, %c0_16] : memref<8x256xf32, #tpu.memory_space<vmem>>, vector<1x64xf32>
    %28 = vector.broadcast %27 : vector<1x64xf32> to vector<8x64xf32>
    %29 = arith.addf %26, %28 : vector<8x64xf32>
    %cst_17 = arith.constant 0.000000e+00 : f32
    %30 = vector.broadcast %cst_17 : f32 to vector<8x64xf32>
    %31 = arith.maximumf %29, %30 : vector<8x64xf32>
    %32 = arith.truncf %31 : vector<8x64xf32> to vector<8x64xbf16>
    %c528 = arith.constant 528 : index
    %c0_18 = arith.constant 0 : index
    %33 = vector.load %arg2[%c528, %c0_18] : memref<592x256xbf16, #tpu.memory_space<vmem>>, vector<64x10xbf16>
    %cst_19 = arith.constant dense<0.000000e+00> : vector<8x10xf32>
    %34 = tpu.matmul %32, %33, %cst_19 {dimension_numbers = #tpu.dot_dimension_numbers<[1], [0], [0], [1], [0, 0, 1, 1], [], []>} : vector<8x64xbf16>, vector<64x10xbf16>, vector<8x10xf32> -> vector<8x10xf32>
    %c4 = arith.constant 4 : index
    %c0_20 = arith.constant 0 : index
    %35 = vector.load %arg3[%c4, %c0_20] : memref<8x256xf32, #tpu.memory_space<vmem>>, vector<1x10xf32>
    %36 = vector.broadcast %35 : vector<1x10xf32> to vector<8x10xf32>
    %37 = arith.addf %34, %36 : vector<8x10xf32>
    %c0_21 = arith.constant 0 : index
    %c0_22 = arith.constant 0 : index
    %38 = vector.load %arg4[%c0_21, %c0_22] : memref<8x10xf32, #tpu.memory_space<vmem>>, vector<8x10xf32>
    tpu.vector_store %arg4[%c0_21, %c0_22], %37 {strides = array<i32>} : memref<8x10xf32, #tpu.memory_space<vmem>>, vector<8x10xf32>,
    return
  }
  func.func @transform_0(%arg0: i32) -> (i32, i32) {
    %c0_i32 = arith.constant 0 : i32
    %c0_i32_0 = arith.constant 0 : i32
    return %arg0, %c0_i32 : i32, i32
  }
  func.func @transform_1(%arg0: i32) -> (i32, i32) {
    %c0_i32 = arith.constant 0 : i32
    %c0_i32_0 = arith.constant 0 : i32
    %c0_i32_1 = arith.constant 0 : i32
    return %c0_i32, %c0_i32_0 : i32, i32
  }
  func.func @transform_2(%arg0: i32) -> (i32, i32) {
    %c0_i32 = arith.constant 0 : i32
    %c0_i32_0 = arith.constant 0 : i32
    %c0_i32_1 = arith.constant 0 : i32
    return %c0_i32, %c0_i32_0 : i32, i32
  }
  func.func @transform_3(%arg0: i32) -> (i32, i32) {
    %c0_i32 = arith.constant 0 : i32
    %c0_i32_0 = arith.constant 0 : i32
    return %arg0, %c0_i32 : i32, i32
  }
}

</mosaic_0001>

<llo_original>
// kernel: iq_network_mcts_forward.1
$region0: #{iq_network_mcts_forward.1}
  #allocation0 [shape = 'u32[]', space=smem, size = 0x4, offset = 0x4, fixed_abs, tag = 'smem constant byte address 0x4 - core index']
  #allocation1 [shape = 'u32[144,128]{1,0:T(1,128)}', space=vmem, size = 0x12000, scoped, tag = 'internal scratch']
  %s0 = inlined_call_operand.vmem [shape: bf16[8,12], index: 0, kind: input, shape index: {}]
  %s1 = inlined_call_operand.hbm [shape: bf16[592,256], index: 1, kind: input, shape index: {}]
  %s2 = inlined_call_operand.hbm [shape: f32[8,256], index: 2, kind: input, shape index: {}]
  %s3 = inlined_call_operand.hbm [shape: f32[8,10], index: 3, kind: output, shape index: {}]
  %s4 = sld [smem:[#allocation0]]
  $region30: #{iq_network_mcts_forward.1} parent=0
    _
  %s6 = ssub.s32 1, %s4
  %s7 = scalar_select 0, %s6, %s4
  $region1: #{iq_network_mcts_forward.1} parent=0
    #allocation2 [shape = 'u8[303104]{0}', space=vmem, size = 0x4a000, scoped, tag = 'input window, operand 1, single buffered']
    #allocation3 [shape = 's32[1]{0}', space=sflag, size = 0x4, scoped, tag = 'scoped memory for iq_network_mcts_forward.1']
    #allocation4 [shape = 's32[1]{0}', space=sflag, size = 0x4, scoped, tag = 'scoped memory for iq_network_mcts_forward.1']
    #allocation5 [shape = 'u8[8192]{0}', space=vmem, size = 0x2000, scoped, tag = 'input window, operand 2, single buffered']
    #allocation6 [shape = 's32[1]{0}', space=sflag, size = 0x4, scoped, tag = 'scoped memory for iq_network_mcts_forward.1']
    #allocation7 [shape = 'u8[4096]{0}', space=vmem, size = 0x1000, scoped, tag = 'output window, operand 0, single buffered']
    %8 = vsyncpa [#allocation3], 0
    %9 = vsyncpa [#allocation6], 0
    %10 = vsyncpa [#allocation4], 0
    // Predicated region
    $region2: #{iq_network_mcts_forward.1} parent=1 // pred_check
      _
    $region3: #{iq_network_mcts_forward.1} parent=1 // pred_check_branch
      %12 = sbr.rel (0) target = $region5
    $region4: #{iq_network_mcts_forward.1} parent=1 // pred_region
      _
    $region5: #{iq_network_mcts_forward.1} parent=1 // pred_fallthru
      _
    // Predicated region
    $region6: #{iq_network_mcts_forward.1} parent=1 // pred_check
      _
    $region7: #{iq_network_mcts_forward.1} parent=1 // pred_check_branch
      %14 = sbr.rel (0) target = $region9
    $region8: #{iq_network_mcts_forward.1} parent=1 // pred_region
      %s16 = ssub.s32 9472, 9472
      %17 = vsyncadd [#allocation3], %s16
      %s18 = sshll.u32 [#allocation2], 4
      %s19 = int_to_ptr.vmem [resolvable:$true] %s18
      %24 = dma.hbm_to_vmem [thread:$0]  %s1, 9472, %s19, [#allocation3], 128, 128, 8
    $region9: #{iq_network_mcts_forward.1} parent=1 // pred_fallthru
      _
    // Predicated region
    $region10: #{iq_network_mcts_forward.1} parent=1 // pred_check
      _
    $region11: #{iq_network_mcts_forward.1} parent=1 // pred_check_branch
      %26 = sbr.rel (0) target = $region13
    $region12: #{iq_network_mcts_forward.1} parent=1 // pred_region
      %s28 = ssub.s32 256, 256
      %29 = vsyncadd [#allocation6], %s28
      %s31 = sshll.u32 [#allocation5], 4
      %s32 = int_to_ptr.vmem [resolvable:$true] %s31
      %34 = dma.hbm_to_vmem [thread:$0]  %s2, 256, %s32, [#allocation6]
    $region13: #{iq_network_mcts_forward.1} parent=1 // pred_fallthru
      _
    // Predicated region
    $region14: #{iq_network_mcts_forward.1} parent=1 // pred_check
      _
    $region15: #{iq_network_mcts_forward.1} parent=1 // pred_check_branch
      %36 = sbr.rel (0) target = $region17
    $region16: #{iq_network_mcts_forward.1} parent=1 // pred_region
      %37 = dma.done [#allocation3], 9472
    $region17: #{iq_network_mcts_forward.1} parent=1 // pred_fallthru
      _
    // Predicated region
    $region18: #{iq_network_mcts_forward.1} parent=1 // pred_check
      _
    $region19: #{iq_network_mcts_forward.1} parent=1 // pred_check_branch
      %39 = sbr.rel (0) target = $region21
    $region20: #{iq_network_mcts_forward.1} parent=1 // pred_region
      %40 = dma.done [#allocation6], 256
    $region21: #{iq_network_mcts_forward.1} parent=1 // pred_fallthru
      _
    %v42 = vld [vmem:[%s0] sm:$0xf]
    %v43 = vld [vmem:[#allocation2] sm:$0xf]
    %v44 = vld [vmem:[#allocation2 + $0x8] sm:$0x3]
    %v45 = vld [vmem:[#allocation5] ss:$0 sm:$0xff]
    %v48 = vunpack.c.l.b16 %v43
    %v49 = vunpack.c.l.b16 %v44
    %v50 = vpack.c.b16 %v49, %v48
    %vm51 = vcmask 97280
    %v53 = vsel %vm51, %v42, 0
    %vm55 = vcmask 1045504
    %v57 = vsel %vm55, %v50, 0
    %59 = vmatprep.subr.bf16.mxu0 0
    %60 = vmatpush1.bf16.msra.mxu0 %v57
    %61 = vmatprep.subr.bf16.mxu0 0
    %62 = vmatpush1.bf16.msra.mxu0 0
    %63 = vmatprep.subr.bf16.mxu0 0
    %64 = vmatpush1.bf16.msra.mxu0 0
    %65 = vmatprep.subr.bf16.mxu0 0
    %66 = vmatpush1.bf16.msra.mxu0 0
    %67 = vmatprep.subr.bf16.mxu0 0
    %68 = vmatpush1.bf16.msra.mxu0 0
    %69 = vmatprep.subr.bf16.mxu0 0
    %70 = vmatpush1.bf16.msra.mxu0 0
    %71 = vmatprep.subr.bf16.mxu0 0
    %72 = vmatpush1.bf16.msra.mxu0 0
    %73 = vmatprep.subr.bf16.mxu0 0
    %74 = vmatpush1.bf16.msra.mxu0 0
    %75 = vmatprep.subr.bf16.mxu0 0
    %76 = vmatpush1.bf16.msra.mxu0 0
    %77 = vmatprep.subr.bf16.mxu0 0
    %78 = vmatpush1.bf16.msra.mxu0 0
    %79 = vmatprep.subr.bf16.mxu0 0
    %80 = vmatpush1.bf16.msra.mxu0 0
    %81 = vmatprep.subr.bf16.mxu0 0
    %82 = vmatpush1.bf16.msra.mxu0 0
    %83 = vmatprep.subr.bf16.mxu0 0
    %84 = vmatpush1.bf16.msra.mxu0 0
    %85 = vmatprep.subr.bf16.mxu0 0
    %86 = vmatpush1.bf16.msra.mxu0 0
    %87 = vmatprep.subr.bf16.mxu0 0
    %88 = vmatpush1.bf16.msra.mxu0 0
    %89 = vmatprep.subr.bf16.mxu0 0
    %90 = vmatpush1.bf16.msra.mxu0 0
    %91 = vmatprep.mubr.bf16.mxu0 0
    %92 = vmatmul.mubr.bf16.gmra.mrb[0].mxu0 %v53
    %v93 = vpop.f32.mrb[0].mxu0
    %v94 = vadd.f32 %v45, %v93
    %v95 = vpop.f32.mrb[0].mxu0
    %v96 = vpop.f32.mrb[0].mxu0
    %v97 = vpop.f32.mrb[0].mxu0
    %98 = vdwg.mxu0
    %v99 = vmax.f32 %v94, 0.0
    %v100 = vpack.c.bf16 %v99, %v99
    %v101 = vld [vmem:[#allocation2 + $0x10] sm:$0xff]
    %v102 = vld [vmem:[#allocation2 + $0x18] sm:$0xff]
    %v103 = vld [vmem:[#allocation2 + $0x20] sm:$0xff]
    %v104 = vld [vmem:[#allocation2 + $0x28] sm:$0xff]
    %v105 = vld [vmem:[#allocation2 + $0x30] sm:$0xff]
    %v106 = vld [vmem:[#allocation2 + $0x38] sm:$0xff]
    %v107 = vld [vmem:[#allocation2 + $0x40] sm:$0xff]
    %v108 = vld [vmem:[#allocation2 + $0x48] sm:$0xff]
    %v109 = vld [vmem:[#allocation2 + $0x50] sm:$0xff]
    %v110 = vld [vmem:[#allocation2 + $0x58] sm:$0xff]
    %v111 = vld [vmem:[#allocation2 + $0x60] sm:$0xff]
    %v112 = vld [vmem:[#allocation2 + $0x68] sm:$0xff]
    %v113 = vld [vmem:[#allocation2 + $0x70] sm:$0xff]
    %v114 = vld [vmem:[#allocation2 + $0x78] sm:$0xff]
    %v115 = vld [vmem:[#allocation2 + $0x80] sm:$0xff]
    %v116 = vld [vmem:[#allocation2 + $0x88] sm:$0xff]
    %s117 = scalar_lea.vmem [#allocation5], 1
    %v118 = vld [vmem:[%s117] ss:$8 sm:$0x3]
    %v120 = vlaneseq
    %v121 = vshrl.u32 %v120, 7
    %v122 = vsub.s32 0, %v121
    %v123 = vrot.slane %v118, %v122
    %v124 = vlaneseq
    %v125 = vshrl.u32 %v124, 7
    %v126 = vsub.s32 1, %v125
    %v127 = vrot.slane %v118, %v126
    %v146 = vunpack.c.l.b16 %v101
    %v147 = vunpack.c.h.b16 %v101
    %v148 = vunpack.c.l.b16 %v102
    %v149 = vunpack.c.h.b16 %v102
    %v150 = vunpack.c.l.b16 %v103
    %v151 = vunpack.c.h.b16 %v103
    %v152 = vunpack.c.l.b16 %v104
    %v153 = vunpack.c.h.b16 %v104
    %v154 = vunpack.c.l.b16 %v105
    %v155 = vunpack.c.h.b16 %v105
    %v156 = vunpack.c.l.b16 %v106
    %v157 = vunpack.c.h.b16 %v106
    %v158 = vunpack.c.l.b16 %v107
    %v159 = vunpack.c.h.b16 %v107
    %v160 = vunpack.c.l.b16 %v108
    %v161 = vunpack.c.h.b16 %v108
    %v162 = vunpack.c.l.b16 %v109
    %v163 = vunpack.c.h.b16 %v109
    %v164 = vunpack.c.l.b16 %v110
    %v165 = vunpack.c.h.b16 %v110
    %v166 = vunpack.c.l.b16 %v111
    %v167 = vunpack.c.h.b16 %v111
    %v168 = vunpack.c.l.b16 %v112
    %v169 = vunpack.c.h.b16 %v112
    %v170 = vunpack.c.l.b16 %v113
    %v171 = vunpack.c.h.b16 %v113
    %v172 = vunpack.c.l.b16 %v114
    %v173 = vunpack.c.h.b16 %v114
    %v174 = vunpack.c.l.b16 %v115
    %v175 = vunpack.c.h.b16 %v115
    %v176 = vunpack.c.l.b16 %v116
    %v177 = vunpack.c.h.b16 %v116
    %v178 = vpack.c.b16 %v148, %v146
    %v179 = vpack.c.b16 %v149, %v147
    %v180 = vpack.c.b16 %v152, %v150
    %v181 = vpack.c.b16 %v153, %v151
    %v182 = vpack.c.b16 %v156, %v154
    %v183 = vpack.c.b16 %v157, %v155
    %v184 = vpack.c.b16 %v160, %v158
    %v185 = vpack.c.b16 %v161, %v159
    %v186 = vpack.c.b16 %v164, %v162
    %v187 = vpack.c.b16 %v165, %v163
    %v188 = vpack.c.b16 %v168, %v166
    %v189 = vpack.c.b16 %v169, %v167
    %v190 = vpack.c.b16 %v172, %v170
    %v191 = vpack.c.b16 %v173, %v171
    %v192 = vpack.c.b16 %v176, %v174
    %v193 = vpack.c.b16 %v177, %v175
    %210 = vmatprep.subr.bf16.mxu0 %v179
    %211 = vmatpush1.bf16.msra.mxu0 %v178
    %212 = vmatprep.subr.bf16.mxu0 %v181
    %213 = vmatpush1.bf16.msra.mxu0 %v180
    %214 = vmatprep.subr.bf16.mxu0 %v183
    %215 = vmatpush1.bf16.msra.mxu0 %v182
    %216 = vmatprep.subr.bf16.mxu0 %v185
    %217 = vmatpush1.bf16.msra.mxu0 %v184
    %218 = vmatprep.subr.bf16.mxu0 %v187
    %219 = vmatpush1.bf16.msra.mxu0 %v186
    %220 = vmatprep.subr.bf16.mxu0 %v189
    %221 = vmatpush1.bf16.msra.mxu0 %v188
    %222 = vmatprep.subr.bf16.mxu0 %v191
    %223 = vmatpush1.bf16.msra.mxu0 %v190
    %224 = vmatprep.subr.bf16.mxu0 %v193
    %225 = vmatpush1.bf16.msra.mxu0 %v192
    %226 = vmatprep.subr.bf16.mxu0 0
    %227 = vmatpush1.bf16.msra.mxu0 0
    %228 = vmatprep.subr.bf16.mxu0 0
    %229 = vmatpush1.bf16.msra.mxu0 0
    %230 = vmatprep.subr.bf16.mxu0 0
    %231 = vmatpush1.bf16.msra.mxu0 0
    %232 = vmatprep.subr.bf16.mxu0 0
    %233 = vmatpush1.bf16.msra.mxu0 0
    %234 = vmatprep.subr.bf16.mxu0 0
    %235 = vmatpush1.bf16.msra.mxu0 0
    %236 = vmatprep.subr.bf16.mxu0 0
    %237 = vmatpush1.bf16.msra.mxu0 0
    %238 = vmatprep.subr.bf16.mxu0 0
    %239 = vmatpush1.bf16.msra.mxu0 0
    %240 = vmatprep.subr.bf16.mxu0 0
    %241 = vmatpush1.bf16.msra.mxu0 0
    %242 = vmatprep.mubr.bf16.mxu0 0
    %243 = vmatmul.mubr.bf16.gmra.mrb[0].mxu0 %v100
    %v244 = vpop.f32.mrb[0].mxu0
    %v245 = vadd.f32 %v123, %v244
    %v246 = vpop.f32.mrb[0].mxu0
    %v247 = vadd.f32 %v127, %v246
    %v248 = vpop.f32.mrb[0].mxu0
    %v249 = vpop.f32.mrb[0].mxu0
    %250 = vdwg.mxu0
    %v251 = vmax.f32 %v245, 0.0
    %v252 = vmax.f32 %v247, 0.0
    %v253 = vpack.c.bf16 %v251, %v251
    %v254 = vpack.c.bf16 %v252, %v252
    %v255 = vld [vmem:[#allocation2 + $0x90] sm:$0xf]
    %v256 = vld [vmem:[#allocation2 + $0x98] sm:$0xf]
    %v257 = vld [vmem:[#allocation2 + $0xa0] sm:$0xf]
    %v258 = vld [vmem:[#allocation2 + $0xa8] sm:$0xf]
    %v259 = vld [vmem:[#allocation2 + $0xb0] sm:$0xf]
    %v260 = vld [vmem:[#allocation2 + $0xb8] sm:$0xf]
    %v261 = vld [vmem:[#allocation2 + $0xc0] sm:$0xf]
    %v262 = vld [vmem:[#allocation2 + $0xc8] sm:$0xf]
    %v263 = vld [vmem:[#allocation2 + $0xd0] sm:$0xf]
    %v264 = vld [vmem:[#allocation2 + $0xd8] sm:$0xf]
    %v265 = vld [vmem:[#allocation2 + $0xe0] sm:$0xf]
    %v266 = vld [vmem:[#allocation2 + $0xe8] sm:$0xf]
    %v267 = vld [vmem:[#allocation2 + $0xf0] sm:$0xf]
    %v268 = vld [vmem:[#allocation2 + $0xf8] sm:$0xf]
    %v269 = vld [vmem:[#allocation2 + $0x100] sm:$0xf]
    %v270 = vld [vmem:[#allocation2 + $0x108] sm:$0xf]
    %v271 = vld [vmem:[#allocation2 + $0x110] sm:$0xf]
    %v272 = vld [vmem:[#allocation2 + $0x118] sm:$0xf]
    %v273 = vld [vmem:[#allocation2 + $0x120] sm:$0xf]
    %v274 = vld [vmem:[#allocation2 + $0x128] sm:$0xf]
    %v275 = vld [vmem:[#allocation2 + $0x130] sm:$0xf]
    %v276 = vld [vmem:[#allocation2 + $0x138] sm:$0xf]
    %v277 = vld [vmem:[#allocation2 + $0x140] sm:$0xf]
    %v278 = vld [vmem:[#allocation2 + $0x148] sm:$0xf]
    %v279 = vld [vmem:[#allocation2 + $0x150] sm:$0xf]
    %v280 = vld [vmem:[#allocation2 + $0x158] sm:$0xf]
    %v281 = vld [vmem:[#allocation2 + $0x160] sm:$0xf]
    %v282 = vld [vmem:[#allocation2 + $0x168] sm:$0xf]
    %v283 = vld [vmem:[#allocation2 + $0x170] sm:$0xf]
    %v284 = vld [vmem:[#allocation2 + $0x178] sm:$0xf]
    %v285 = vld [vmem:[#allocation2 + $0x180] sm:$0xf]
    %v286 = vld [vmem:[#allocation2 + $0x188] sm:$0xf]
    %v287 = vld [vmem:[#allocation5 + $0x2] ss:$0 sm:$0xff]
    %v320 = vunpack.c.l.b16 %v255
    %v321 = vunpack.c.l.b16 %v256
    %v322 = vunpack.c.l.b16 %v257
    %v323 = vunpack.c.l.b16 %v258
    %v324 = vunpack.c.l.b16 %v259
    %v325 = vunpack.c.l.b16 %v260
    %v326 = vunpack.c.l.b16 %v261
    %v327 = vunpack.c.l.b16 %v262
    %v328 = vunpack.c.l.b16 %v263
    %v329 = vunpack.c.l.b16 %v264
    %v330 = vunpack.c.l.b16 %v265
    %v331 = vunpack.c.l.b16 %v266
    %v332 = vunpack.c.l.b16 %v267
    %v333 = vunpack.c.l.b16 %v268
    %v334 = vunpack.c.l.b16 %v269
    %v335 = vunpack.c.l.b16 %v270
    %v336 = vunpack.c.l.b16 %v271
    %v337 = vunpack.c.l.b16 %v272
    %v338 = vunpack.c.l.b16 %v273
    %v339 = vunpack.c.l.b16 %v274
    %v340 = vunpack.c.l.b16 %v275
    %v341 = vunpack.c.l.b16 %v276
    %v342 = vunpack.c.l.b16 %v277
    %v343 = vunpack.c.l.b16 %v278
    %v344 = vunpack.c.l.b16 %v279
    %v345 = vunpack.c.l.b16 %v280
    %v346 = vunpack.c.l.b16 %v281
    %v347 = vunpack.c.l.b16 %v282
    %v348 = vunpack.c.l.b16 %v283
    %v349 = vunpack.c.l.b16 %v284
    %v350 = vunpack.c.l.b16 %v285
    %v351 = vunpack.c.l.b16 %v286
    %v352 = vpack.c.b16 %v321, %v320
    %v353 = vpack.c.b16 %v323, %v322
    %v354 = vpack.c.b16 %v325, %v324
    %v355 = vpack.c.b16 %v327, %v326
    %v356 = vpack.c.b16 %v329, %v328
    %v357 = vpack.c.b16 %v331, %v330
    %v358 = vpack.c.b16 %v333, %v332
    %v359 = vpack.c.b16 %v335, %v334
    %v360 = vpack.c.b16 %v337, %v336
    %v361 = vpack.c.b16 %v339, %v338
    %v362 = vpack.c.b16 %v341, %v340
    %v363 = vpack.c.b16 %v343, %v342
    %v364 = vpack.c.b16 %v345, %v344
    %v365 = vpack.c.b16 %v347, %v346
    %v366 = vpack.c.b16 %v349, %v348
    %v367 = vpack.c.b16 %v351, %v350
    %384 = vmatprep.subr.bf16.mxu0 0
    %385 = vmatpush1.bf16.msra.mxu0 %v352
    %386 = vmatprep.subr.bf16.mxu0 0
    %387 = vmatpush1.bf16.msra.mxu0 %v353
    %388 = vmatprep.subr.bf16.mxu0 0
    %389 = vmatpush1.bf16.msra.mxu0 %v354
    %390 = vmatprep.subr.bf16.mxu0 0
    %391 = vmatpush1.bf16.msra.mxu0 %v355
    %392 = vmatprep.subr.bf16.mxu0 0
    %393 = vmatpush1.bf16.msra.mxu0 %v356
    %394 = vmatprep.subr.bf16.mxu0 0
    %395 = vmatpush1.bf16.msra.mxu0 %v357
    %396 = vmatprep.subr.bf16.mxu0 0
    %397 = vmatpush1.bf16.msra.mxu0 %v358
    %398 = vmatprep.subr.bf16.mxu0 0
    %399 = vmatpush1.bf16.msra.mxu0 %v359
    %400 = vmatprep.subr.bf16.mxu0 0
    %401 = vmatpush1.bf16.msra.mxu0 %v360
    %402 = vmatprep.subr.bf16.mxu0 0
    %403 = vmatpush1.bf16.msra.mxu0 %v361
    %404 = vmatprep.subr.bf16.mxu0 0
    %405 = vmatpush1.bf16.msra.mxu0 %v362
    %406 = vmatprep.subr.bf16.mxu0 0
    %407 = vmatpush1.bf16.msra.mxu0 %v363
    %408 = vmatprep.subr.bf16.mxu0 0
    %409 = vmatpush1.bf16.msra.mxu0 %v364
    %410 = vmatprep.subr.bf16.mxu0 0
    %411 = vmatpush1.bf16.msra.mxu0 %v365
    %412 = vmatprep.subr.bf16.mxu0 0
    %413 = vmatpush1.bf16.msra.mxu0 %v366
    %414 = vmatprep.subr.bf16.mxu0 0
    %415 = vmatpush1.bf16.msra.mxu0 %v367
    %416 = vmatprep.mubr.bf16.mxu0 %v254
    %417 = vmatmul.mubr.bf16.gmra.mrb[0].mxu0 %v253
    %v418 = vpop.f32.mrb[0].mxu0
    %v419 = vadd.f32 %v287, %v418
    %v420 = vpop.f32.mrb[0].mxu0
    %v421 = vpop.f32.mrb[0].mxu0
    %v422 = vpop.f32.mrb[0].mxu0
    %423 = vdwg.mxu0
    %v424 = vmax.f32 %v419, 0.0
    %v425 = vpack.c.bf16 %v424, %v424
    %v426 = vld [vmem:[#allocation2 + $0x190] sm:$0xf]
    %v427 = vld [vmem:[#allocation2 + $0x198] sm:$0xf]
    %v428 = vld [vmem:[#allocation2 + $0x1a0] sm:$0xf]
    %v429 = vld [vmem:[#allocation2 + $0x1a8] sm:$0xf]
    %v430 = vld [vmem:[#allocation2 + $0x1b0] sm:$0xf]
    %v431 = vld [vmem:[#allocation2 + $0x1b8] sm:$0xf]
    %v432 = vld [vmem:[#allocation2 + $0x1c0] sm:$0xf]
    %v433 = vld [vmem:[#allocation2 + $0x1c8] sm:$0xf]
    %v434 = vld [vmem:[#allocation2 + $0x1d0] sm:$0xf]
    %v435 = vld [vmem:[#allocation2 + $0x1d8] sm:$0xf]
    %v436 = vld [vmem:[#allocation2 + $0x1e0] sm:$0xf]
    %v437 = vld [vmem:[#allocation2 + $0x1e8] sm:$0xf]
    %v438 = vld [vmem:[#allocation2 + $0x1f0] sm:$0xf]
    %v439 = vld [vmem:[#allocation2 + $0x1f8] sm:$0xf]
    %v440 = vld [vmem:[#allocation2 + $0x200] sm:$0xf]
    %v441 = vld [vmem:[#allocation2 + $0x208] sm:$0xf]
    %v442 = vld [vmem:[#allocation5 + $0x3] ss:$0 sm:$0xff]
    %v459 = vunpack.c.l.b16 %v426
    %v460 = vunpack.c.l.b16 %v427
    %v461 = vunpack.c.l.b16 %v428
    %v462 = vunpack.c.l.b16 %v429
    %v463 = vunpack.c.l.b16 %v430
    %v464 = vunpack.c.l.b16 %v431
    %v465 = vunpack.c.l.b16 %v432
    %v466 = vunpack.c.l.b16 %v433
    %v467 = vunpack.c.l.b16 %v434
    %v468 = vunpack.c.l.b16 %v435
    %v469 = vunpack.c.l.b16 %v436
    %v470 = vunpack.c.l.b16 %v437
    %v471 = vunpack.c.l.b16 %v438
    %v472 = vunpack.c.l.b16 %v439
    %v473 = vunpack.c.l.b16 %v440
    %v474 = vunpack.c.l.b16 %v441
    %v475 = vpack.c.b16 %v460, %v459
    %v476 = vpack.c.b16 %v462, %v461
    %v477 = vpack.c.b16 %v464, %v463
    %v478 = vpack.c.b16 %v466, %v465
    %v479 = vpack.c.b16 %v468, %v467
    %v480 = vpack.c.b16 %v470, %v469
    %v481 = vpack.c.b16 %v472, %v471
    %v482 = vpack.c.b16 %v474, %v473
    %491 = vmatprep.subr.bf16.mxu0 0
    %492 = vmatpush1.bf16.msra.mxu0 %v475
    %493 = vmatprep.subr.bf16.mxu0 0
    %494 = vmatpush1.bf16.msra.mxu0 %v476
    %495 = vmatprep.subr.bf16.mxu0 0
    %496 = vmatpush1.bf16.msra.mxu0 %v477
    %497 = vmatprep.subr.bf16.mxu0 0
    %498 = vmatpush1.bf16.msra.mxu0 %v478
    %499 = vmatprep.subr.bf16.mxu0 0
    %500 = vmatpush1.bf16.msra.mxu0 %v479
    %501 = vmatprep.subr.bf16.mxu0 0
    %502 = vmatpush1.bf16.msra.mxu0 %v480
    %503 = vmatprep.subr.bf16.mxu0 0
    %504 = vmatpush1.bf16.msra.mxu0 %v481
    %505 = vmatprep.subr.bf16.mxu0 0
    %506 = vmatpush1.bf16.msra.mxu0 %v482
    %507 = vmatprep.subr.bf16.mxu0 0
    %508 = vmatpush1.bf16.msra.mxu0 0
    %509 = vmatprep.subr.bf16.mxu0 0
    %510 = vmatpush1.bf16.msra.mxu0 0
    %511 = vmatprep.subr.bf16.mxu0 0
    %512 = vmatpush1.bf16.msra.mxu0 0
    %513 = vmatprep.subr.bf16.mxu0 0
    %514 = vmatpush1.bf16.msra.mxu0 0
    %515 = vmatprep.subr.bf16.mxu0 0
    %516 = vmatpush1.bf16.msra.mxu0 0
    %517 = vmatprep.subr.bf16.mxu0 0
    %518 = vmatpush1.bf16.msra.mxu0 0
    %519 = vmatprep.subr.bf16.mxu0 0
    %520 = vmatpush1.bf16.msra.mxu0 0
    %521 = vmatprep.subr.bf16.mxu0 0
    %522 = vmatpush1.bf16.msra.mxu0 0
    %523 = vmatprep.mubr.bf16.mxu0 0
    %524 = vmatmul.mubr.bf16.gmra.mrb[0].mxu0 %v425
    %v525 = vpop.f32.mrb[0].mxu0
    %v526 = vadd.f32 %v442, %v525
    %v527 = vpop.f32.mrb[0].mxu0
    %v528 = vpop.f32.mrb[0].mxu0
    %v529 = vpop.f32.mrb[0].mxu0
    %530 = vdwg.mxu0
    %v531 = vmax.f32 %v526, 0.0
    %v532 = vpack.c.bf16 %v531, %v531
    %v533 = vld [vmem:[#allocation2 + $0x210] sm:$0xf]
    %v534 = vld [vmem:[#allocation2 + $0x218] sm:$0xf]
    %v535 = vld [vmem:[#allocation2 + $0x220] sm:$0xf]
    %v536 = vld [vmem:[#allocation2 + $0x228] sm:$0xf]
    %v537 = vld [vmem:[#allocation2 + $0x230] sm:$0xf]
    %v538 = vld [vmem:[#allocation2 + $0x238] sm:$0xf]
    %v539 = vld [vmem:[#allocation2 + $0x240] sm:$0xf]
    %v540 = vld [vmem:[#allocation2 + $0x248] sm:$0xf]
    %v541 = vld [vmem:[#allocation5 + $0x4] ss:$0 sm:$0xff]
    %v550 = vunpack.c.l.b16 %v533
    %v551 = vunpack.c.l.b16 %v534
    %v552 = vunpack.c.l.b16 %v535
    %v553 = vunpack.c.l.b16 %v536
    %v554 = vunpack.c.l.b16 %v537
    %v555 = vunpack.c.l.b16 %v538
    %v556 = vunpack.c.l.b16 %v539
    %v557 = vunpack.c.l.b16 %v540
    %v558 = vpack.c.b16 %v551, %v550
    %v559 = vpack.c.b16 %v553, %v552
    %v560 = vpack.c.b16 %v555, %v554
    %v561 = vpack.c.b16 %v557, %v556
    %vm566 = vcmask 523264
    %v568 = vsel %vm566, %v532, 0
    %570 = vmatprep.subr.bf16.mxu0 0
    %571 = vmatpush1.bf16.msra.mxu0 %v558
    %572 = vmatprep.subr.bf16.mxu0 0
    %573 = vmatpush1.bf16.msra.mxu0 %v559
    %574 = vmatprep.subr.bf16.mxu0 0
    %575 = vmatpush1.bf16.msra.mxu0 %v560
    %576 = vmatprep.subr.bf16.mxu0 0
    %577 = vmatpush1.bf16.msra.mxu0 %v561
    %578 = vmatprep.subr.bf16.mxu0 0
    %579 = vmatpush1.bf16.msra.mxu0 0
    %580 = vmatprep.subr.bf16.mxu0 0
    %581 = vmatpush1.bf16.msra.mxu0 0
    %582 = vmatprep.subr.bf16.mxu0 0
    %583 = vmatpush1.bf16.msra.mxu0 0
    %584 = vmatprep.subr.bf16.mxu0 0
    %585 = vmatpush1.bf16.msra.mxu0 0
    %586 = vmatprep.subr.bf16.mxu0 0
    %587 = vmatpush1.bf16.msra.mxu0 0
    %588 = vmatprep.subr.bf16.mxu0 0
    %589 = vmatpush1.bf16.msra.mxu0 0
    %590 = vmatprep.subr.bf16.mxu0 0
    %591 = vmatpush1.bf16.msra.mxu0 0
    %592 = vmatprep.subr.bf16.mxu0 0
    %593 = vmatpush1.bf16.msra.mxu0 0
    %594 = vmatprep.subr.bf16.mxu0 0
    %595 = vmatpush1.bf16.msra.mxu0 0
    %596 = vmatprep.subr.bf16.mxu0 0
    %597 = vmatpush1.bf16.msra.mxu0 0
    %598 = vmatprep.subr.bf16.mxu0 0
    %599 = vmatpush1.bf16.msra.mxu0 0
    %600 = vmatprep.subr.bf16.mxu0 0
    %601 = vmatpush1.bf16.msra.mxu0 0
    %602 = vmatprep.mubr.bf16.mxu0 0
    %603 = vmatmul.mubr.bf16.gmra.mrb[0].mxu0 %v568
    %v604 = vpop.f32.mrb[0].mxu0
    %v605 = vadd.f32 %v541, %v604
    %v606 = vpop.f32.mrb[0].mxu0
    %v607 = vpop.f32.mrb[0].mxu0
    %v608 = vpop.f32.mrb[0].mxu0
    %609 = vdwg.mxu0
    %vm610 = vcmask 80896
    %611 = vst.msk [vmem:[#allocation7] sm:$0xff] %vm610, %v605
    // Predicated region
    $region22: #{iq_network_mcts_forward.1} parent=1 // pred_check
      _
    $region23: #{iq_network_mcts_forward.1} parent=1 // pred_check_branch
      %613 = sbr.rel (0) target = $region25
    $region24: #{iq_network_mcts_forward.1} parent=1 // pred_region
      %s615 = ssub.s32 128, 128
      %616 = vsyncadd [#allocation4], %s615
      %s618 = sshll.u32 [#allocation7], 4
      %s619 = int_to_ptr.vmem [resolvable:$true] %s618
      %621 = dma.vmem_to_hbm [thread:$0]  %s619, 128, %s3, [#allocation4]
    $region25: #{iq_network_mcts_forward.1} parent=1 // pred_fallthru
      _
    // Predicated region
    $region26: #{iq_network_mcts_forward.1} parent=1 // pred_check
      _
    $region27: #{iq_network_mcts_forward.1} parent=1 // pred_check_branch
      %623 = sbr.rel (0) target = $region29
    $region28: #{iq_network_mcts_forward.1} parent=1 // pred_region
      %624 = dma.done [#allocation4], 128
    $region29: #{iq_network_mcts_forward.1} parent=1 // pred_fallthru
      _
    %625 = vsyncpa [#allocation3], 1
    %626 = vsyncpa [#allocation6], 1
    %627 = vsyncpa [#allocation4], 1

</llo_original>
